<compile_context>
chip_gen: v7x
topology: tpu7x:2x2x1
jax: 0.10.0
libtpu: 0.0.40
codegen_flags: <defaults>
</compile_context>

<pallas_src>
import functools

import jax
import jax.numpy as jnp
from jax import lax
from jax.experimental import pallas as pl
from jax.experimental.pallas import tpu as pltpu

KH = KW = 3  # 3x3 conv in the stand-in deducer


# ----------------------------------------------------------------------------
# Fused kernel: deducer conv (3x3 SAME) + all loss/metric reductions
# ----------------------------------------------------------------------------
def _build_fused_kernel(B, Cin, Cout, H, W, loss_gradient0):
    HW = H * W
    PAD = 128  # lane-aligned zero padding -> all concats are 128-lane aligned

    def kernel(w_ref, b_ref, cw_ref, col_ref, x_ref, tar_ref, out_ref):
        # w_ref : SMEM (Cout*Cin*9,) f32    b_ref : SMEM (Cout,) f32
        # cw_ref: SMEM (2,) f32             col_ref: VMEM (1, HW) int32  (pos % W)
        # x_ref : VMEM (B, Cin, HW)         tar_ref: VMEM (B, 2, HW)
        # out_ref: VMEM (1, 128) f32 -> [loss, y_error, k_error, 0, ...]
        f32 = jnp.float32

        # Position masks, all (1, HW); broadcast over batch inside jnp.where.
        flat = lax.broadcasted_iota(jnp.int32, (1, HW), 1)   # flattened position p
        col = col_ref[...]                                   # p % W (precomputed host-side)
        col_lo = col >= 1              # j-1 in range
        col_hi = col < (W - 1)         # j+1 in range
        row_lo = flat >= W             # i-1 in range
        row_hi = flat < (H - 1) * W    # i+1 in range

        def tap_mask(dh, dw):
            m = None
            if dh == -1:
                m = row_lo
            elif dh == 1:
                m = row_hi
            if dw == -1:
                m = col_lo if m is None else (m & col_lo)
            elif dw == 1:
                m = col_hi if m is None else (m & col_hi)
            return m

        masks = {(dh, dw): tap_mask(dh, dw)
                 for dh in (-1, 0, 1) for dw in (-1, 0, 1)}

        x = x_ref[...].astype(f32)       # (B, Cin, HW)
        tar = tar_ref[...].astype(f32)   # (B, 2, HW)

        # ------- deducer: 3x3 SAME conv on the flat (lane-dense) layout ----------
        # Taps are computed once per input channel and reused for every output channel.
        accs = [jnp.zeros((B, HW), f32) + b_ref[co] for co in range(Cout)]
        zpad = jnp.zeros((B, PAD), f32)
        for ci in range(Cin):
            plane = x[:, ci, :]                                   # (B, HW)
            ext = jnp.concatenate([zpad, plane, zpad], axis=1)    # (B, HW + 2*PAD)
            for kh in range(KH):
                dh = kh - 1
                for kw in range(KW):
                    dw = kw - 1
                    s = dh * W + dw
                    tap = ext[:, PAD + s:PAD + s + HW]            # tap[p] = plane[p + s]
                    m = masks[(dh, dw)]
                    if m is not None:
                        tap = jnp.where(m, tap, 0.0)
                    for co in range(Cout):
                        wv = w_ref[(co * Cin + ci) * (KH * KW) + kh * KW + kw]
                        accs[co] = accs[co] + tap * wv

        # ------- loss & metrics ---------------------------------------------------
        def ssum(v):  # full-array sum kept 2D as (1, 1)
            return jnp.sum(v, keepdims=True)

        cw0 = cw_ref[0]
        cw1 = cw_ref[1]
        p0 = accs[0] * cw0               # channel-weighted prediction, channel 0
        p1 = accs[1] * cw1
        t0_raw = tar[:, 0, :]            # raw target ch0 (gradient loss uses the raw target)
        t1_raw = tar[:, 1, :]
        d0 = p0 - t0_raw * cw0
        d1 = p1 - t1_raw * cw1

        inv_n = 1.0 / float(B * Cout * H * W)
        loss = (ssum(d0 * d0) + ssum(d1 * d1)) * inv_n            # F.mse_loss (mean)

        if loss_gradient0 > 0.0:
            p0e = jnp.concatenate([p0, zpad], axis=1)             # zero-extended (aligned)
            t0e = jnp.concatenate([t0_raw, zpad], axis=1)
            # x-direction finite difference (+1 neighbour), valid where col < W-1
            gx = (p0e[:, 1:1 + HW] - p0) - (t0e[:, 1:1 + HW] - t0_raw)
            gx = jnp.where(col_hi, gx, 0.0)
            # y-direction finite difference (+W neighbour), valid where row < H-1
            gy = (p0e[:, W:W + HW] - p0) - (t0e[:, W:W + HW] - t0_raw)
            gy = jnp.where(row_hi, gy, 0.0)
            grad_loss = (ssum(gx * gx) * (1.0 / (B * H * (W - 1))) +
                         ssum(gy * gy) * (1.0 / (B * (H - 1) * W)))
            loss = loss + grad_loss * (loss_gradient0 * loss_gradient0)

        # eval metrics (mask == ones -> mask_sum == B*2*H*W)
        y_err = ssum(jnp.abs(d0)) / cw0 * inv_n
        k_err = ssum(jnp.abs(d1)) / cw1 * inv_n

        # single lane-dense packed output
        lane = lax.broadcasted_iota(jnp.int32, (1, 128), 1)
        packed = jnp.where(lane == 0, loss, 0.0)
        packed = jnp.where(lane == 1, y_err, packed)
        packed = jnp.where(lane == 2, k_err, packed)
        out_ref[...] = packed

    return kernel


def _score_regression_fused(x, target, weight, bias, channel_weights, *, loss_gradient0):
    B, Cin, H, W = x.shape
    Cout = weight.shape[0]
    assert Cout == 2, "ScoreRegressionLoss assumes 2 regression channels"
    HW = H * W

    # Lane-dense operand layout (H*W on the lane axis); drop the unused mask channel so
    # it is never DMA'd into the kernel.
    x_flat = x.reshape(B, Cin, HW)
    tar_flat = target[:, :2, :, :].reshape(B, 2, HW)
    col_ids = (jnp.arange(HW, dtype=jnp.int32) % W).reshape(1, HW)

    kernel = _build_fused_kernel(B, Cin, Cout, H, W, float(loss_gradient0))
    out = pl.pallas_call(
        kernel,
        out_shape=jax.ShapeDtypeStruct((1, 128), jnp.float32),
        in_specs=[
            pl.BlockSpec(memory_space=pltpu.MemorySpace.SMEM),   # conv weights (flat)
            pl.BlockSpec(memory_space=pltpu.MemorySpace.SMEM),   # conv bias
            pl.BlockSpec(memory_space=pltpu.MemorySpace.SMEM),   # channel weights
            pl.BlockSpec(memory_space=pltpu.MemorySpace.VMEM),   # col indices (1, HW)
            pl.BlockSpec(memory_space=pltpu.MemorySpace.VMEM),   # input (B, Cin, HW)
            pl.BlockSpec(memory_space=pltpu.MemorySpace.VMEM),   # target (B, 2, HW)
        ],
        out_specs=pl.BlockSpec(memory_space=pltpu.MemorySpace.VMEM),
    )(weight.reshape(-1).astype(jnp.float32),
      bias.astype(jnp.float32),
      channel_weights.astype(jnp.float32),
      col_ids, x_flat, tar_flat)
    return out[0, 0], out[0, 1], out[0, 2]


# ----------------------------------------------------------------------------
# Module wrapper
# ----------------------------------------------------------------------------
class ScoreRegressionLossPallas:
    def __init__(self, out_channels=2, in_channels=1, with_mask=False,
                 loss_gradient0=0.0, channel_weights=(1.0, 1.0),
                 key=jax.random.PRNGKey(0)):
        assert not with_mask  # TODO(synk): masked-loss branch not implemented
        self.with_mask = with_mask
        self.loss_gradient0 = float(loss_gradient0)
        self.channel_weights = jnp.asarray(channel_weights, jnp.float32)  # (2,)

        # Deducer parameters (stand-in 3x3 conv), Xavier-uniform init (init_param=True)
        kw_, kb_ = jax.random.split(key)
        fan_in = in_channels * KH * KW
        fan_out = out_channels * KH * KW
        a = (6.0 / (fan_in + fan_out)) ** 0.5
        self.weight = jax.random.uniform(
            kw_, (out_channels, in_channels, KH, KW), jnp.float32, -a, a)
        b = 1.0 / (fan_in ** 0.5)
        self.bias = jax.random.uniform(kb_, (out_channels,), jnp.float32, -b, b)

        # jit the fused wrapper so reshape/slice + pallas_call dispatch as ONE executable
        # (loss_gradient0 is a static closure constant).
        self._fused = jax.jit(functools.partial(
            _score_regression_fused, loss_gradient0=self.loss_gradient0))

    def forward(self, batch, training=True):
        inp, target = batch
        loss, y_err, k_err = self._fused(
            inp, target, self.weight, self.bias, self.channel_weights)
        # NOTE: metrics stay as jnp scalars (no blocking float() host sync here);
        # convert to Python floats only at the logging boundary.
        metric = {'loss': loss}
        if not training:
            metric['y_error'] = y_err
            metric['k_error'] = k_err
        return loss, metric


# ----------------------------------------------------------------------------
# Pure-JAX reference (for correctness check only)
# ----------------------------------------------------------------------------
def reference_forward(inp, target, weight, bias, cw, loss_gradient0, training):
    pred = lax.conv_general_dilated(
        inp, weight, window_strides=(1, 1), padding='SAME',
        dimension_numbers=('NCHW', 'OIHW', 'NCHW')) + bias.reshape(1, -1, 1, 1)
    cwb = cw.reshape(1, 2, 1, 1)
    predw = pred * cwb
    tarw = target[:, :2] * cwb
    loss = jnp.mean((predw - tarw) ** 2)
    if loss_gradient0 > 0:
        p0 = predw[:, 0:1]
        t0 = target[:, 0:1]
        gl = jnp.mean(((p0[:, :, :, 1:] - p0[:, :, :, :-1]) -
                       (t0[:, :, :, 1:] - t0[:, :, :, :-1])) ** 2)
        gl = gl + jnp.mean(((p0[:, :, 1:, :] - p0[:, :, :-1, :]) -
                            (t0[:, :, 1:, :] - t0[:, :, :-1, :])) ** 2)
        loss = loss + gl * loss_gradient0 * loss_gradient0
    metric = {'loss': loss}
    if not training:
        mask = jnp.ones_like(predw)
        mask_sum = mask.sum()
        metric['y_error'] = (jnp.abs(predw[:, 0] - tarw[:, 0]) * mask[:, 0]
                             / cw[0]).sum() / mask_sum
        metric['k_error'] = (jnp.abs(predw[:, 1] - tarw[:, 1]) * mask[:, 0]
                             / cw[1]).sum() / mask_sum
    return loss, metric


if __name__ == "__main__":
    key = jax.random.PRNGKey(0)
    k_in, k_tar, k_param = jax.random.split(key, 3)

    B, Cin, Cout, H, W = 2, 1, 2, 16, 16
    x = jax.random.normal(k_in, (B, Cin, H, W), jnp.float32)
    # target: channels 0,1 are regression targets; channel 2 is the (unused) mask slot
    target = jax.random.normal(k_tar, (B, 3, H, W), jnp.float32)

    model = ScoreRegressionLossPallas(
        out_channels=Cout, in_channels=Cin, with_mask=False,
        loss_gradient0=0.3, channel_weights=(1.0, 0.5), key=k_param)

    loss, metric = model.forward((x, target), training=False)
    jax.block_until_ready(loss)

    ref_loss, ref_metric = reference_forward(
        x, target, model.weight, model.bias, model.channel_weights,
        model.loss_gradient0, training=False)

    assert abs(float(loss) - float(ref_loss)) < 1e-4, (float(loss), float(ref_loss))
    assert abs(float(metric['y_error']) - float(ref_metric['y_error'])) < 1e-4
    assert abs(float(metric['k_error']) - float(ref_metric['k_error'])) < 1e-4

    # also exercise the loss_gradient0 == 0 (no gradient-loss) / training branch
    model0 = ScoreRegressionLossPallas(
        out_channels=Cout, in_channels=Cin, with_mask=False,
        loss_gradient0=0.0, channel_weights=(1.0, 0.5), key=k_param)
    loss0, _ = model0.forward((x, target), training=True)
    jax.block_until_ready(loss0)
    ref_loss0, _ = reference_forward(
        x, target, model0.weight, model0.bias, model0.channel_weights,
        0.0, training=True)
    assert abs(float(loss0) - float(ref_loss0)) < 1e-4, (float(loss0), float(ref_loss0))

    print("KERNEL_OK")
</pallas_src>

<mosaic_0001>
module attributes {stable_mosaic.version = 11 : i64} {
  func.func @kernel(%arg0: memref<18xf32, #tpu.memory_space<smem>>, %arg1: memref<2xf32, #tpu.memory_space<smem>>, %arg2: memref<2xf32, #tpu.memory_space<smem>>, %arg3: memref<1x256xi32, #tpu.memory_space<vmem>>, %arg4: memref<2x1x256xf32, #tpu.memory_space<vmem>>, %arg5: memref<2x2x256xf32, #tpu.memory_space<vmem>>, %arg6: memref<1x128xf32, #tpu.memory_space<vmem>>) attributes {dimension_semantics = [], scalar_prefetch = 0 : i64, scratch_operands = 0 : i64, tpu.core_type = #tpu.core_type<tc>} {
    %0 = tpu.iota {dimensions = array<i32: 1>} : vector<1x256xi32>
    %c0 = arith.constant 0 : index
    %c0_0 = arith.constant 0 : index
    %1 = vector.load %arg3[%c0, %c0_0] : memref<1x256xi32, #tpu.memory_space<vmem>>, vector<1x256xi32>
    %c1_i32 = arith.constant 1 : i32
    %2 = vector.broadcast %c1_i32 : i32 to vector<1x256xi32>
    %3 = arith.cmpi sge, %1, %2 : vector<1x256xi32>
    %c15_i32 = arith.constant 15 : i32
    %4 = vector.broadcast %c15_i32 : i32 to vector<1x256xi32>
    %5 = arith.cmpi slt, %1, %4 : vector<1x256xi32>
    %c16_i32 = arith.constant 16 : i32
    %6 = vector.broadcast %c16_i32 : i32 to vector<1x256xi32>
    %7 = arith.cmpi sge, %0, %6 : vector<1x256xi32>
    %c240_i32 = arith.constant 240 : i32
    %8 = vector.broadcast %c240_i32 : i32 to vector<1x256xi32>
    %9 = arith.cmpi slt, %0, %8 : vector<1x256xi32>
    %10 = arith.andi %7, %3 : vector<1x256xi1>
    %11 = arith.andi %7, %5 : vector<1x256xi1>
    %12 = arith.andi %9, %3 : vector<1x256xi1>
    %13 = arith.andi %9, %5 : vector<1x256xi1>
    %c0_1 = arith.constant 0 : index
    %c0_2 = arith.constant 0 : index
    %c0_3 = arith.constant 0 : index
    %14 = vector.load %arg4[%c0_1, %c0_2, %c0_3] : memref<2x1x256xf32, #tpu.memory_space<vmem>>, vector<2x1x256xf32>
    %c0_4 = arith.constant 0 : index
    %c0_5 = arith.constant 0 : index
    %c0_6 = arith.constant 0 : index
    %15 = vector.load %arg5[%c0_4, %c0_5, %c0_6] : memref<2x2x256xf32, #tpu.memory_space<vmem>>, vector<2x2x256xf32>
    %cst = arith.constant 0.000000e+00 : f32
    %16 = vector.broadcast %cst : f32 to vector<2x256xf32>
    %c0_7 = arith.constant 0 : index
    %17 = memref.load %arg1[%c0_7] : memref<2xf32, #tpu.memory_space<smem>>
    %18 = vector.broadcast %17 : f32 to vector<2x256xf32>
    %19 = arith.addf %16, %18 : vector<2x256xf32>
    %cst_8 = arith.constant 0.000000e+00 : f32
    %20 = vector.broadcast %cst_8 : f32 to vector<2x256xf32>
    %c1 = arith.constant 1 : index
    %21 = memref.load %arg1[%c1] : memref<2xf32, #tpu.memory_space<smem>>
    %22 = vector.broadcast %21 : f32 to vector<2x256xf32>
    %23 = arith.addf %20, %22 : vector<2x256xf32>
    %cst_9 = arith.constant 0.000000e+00 : f32
    %24 = vector.broadcast %cst_9 : f32 to vector<2x128xf32>
    %25 = vector.shape_cast %14 : vector<2x1x256xf32> to vector<2x256xf32>
    %26 = tpu.concatenate %24, %25, %24 in 1 : vector<2x128xf32>, vector<2x256xf32>, vector<2x128xf32> -> vector<2x512xf32>
    %27 = vector.extract_strided_slice %26 {offsets = [0, 111], sizes = [2, 256], strides = [1, 1]} : vector<2x512xf32> to vector<2x256xf32>
    %cst_10 = arith.constant 0.000000e+00 : f32
    %28 = vector.shape_cast %10 : vector<1x256xi1> to vector<1x256xi1>
    %29 = vector.broadcast %28 : vector<1x256xi1> to vector<2x256xi1>
    %30 = vector.broadcast %cst_10 : f32 to vector<2x256xf32>
    %31 = arith.select %29, %27, %30 : vector<2x256xi1>, vector<2x256xf32>
    %c0_11 = arith.constant 0 : index
    %32 = memref.load %arg0[%c0_11] : memref<18xf32, #tpu.memory_space<smem>>
    %33 = vector.broadcast %32 : f32 to vector<2x256xf32>
    %34 = arith.mulf %31, %33 : vector<2x256xf32>
    %35 = arith.addf %19, %34 : vector<2x256xf32>
    %c9 = arith.constant 9 : index
    %36 = memref.load %arg0[%c9] : memref<18xf32, #tpu.memory_space<smem>>
    %37 = vector.broadcast %36 : f32 to vector<2x256xf32>
    %38 = arith.mulf %31, %37 : vector<2x256xf32>
    %39 = arith.addf %23, %38 : vector<2x256xf32>
    %40 = vector.extract_strided_slice %26 {offsets = [0, 112], sizes = [2, 256], strides = [1, 1]} : vector<2x512xf32> to vector<2x256xf32>
    %cst_12 = arith.constant 0.000000e+00 : f32
    %41 = vector.shape_cast %7 : vector<1x256xi1> to vector<1x256xi1>
    %42 = vector.broadcast %41 : vector<1x256xi1> to vector<2x256xi1>
    %43 = vector.broadcast %cst_12 : f32 to vector<2x256xf32>
    %44 = arith.select %42, %40, %43 : vector<2x256xi1>, vector<2x256xf32>
    %c1_13 = arith.constant 1 : index
    %45 = memref.load %arg0[%c1_13] : memref<18xf32, #tpu.memory_space<smem>>
    %46 = vector.broadcast %45 : f32 to vector<2x256xf32>
    %47 = arith.mulf %44, %46 : vector<2x256xf32>
    %48 = arith.addf %35, %47 : vector<2x256xf32>
    %c10 = arith.constant 10 : index
    %49 = memref.load %arg0[%c10] : memref<18xf32, #tpu.memory_space<smem>>
    %50 = vector.broadcast %49 : f32 to vector<2x256xf32>
    %51 = arith.mulf %44, %50 : vector<2x256xf32>
    %52 = arith.addf %39, %51 : vector<2x256xf32>
    %53 = vector.extract_strided_slice %26 {offsets = [0, 113], sizes = [2, 256], strides = [1, 1]} : vector<2x512xf32> to vector<2x256xf32>
    %cst_14 = arith.constant 0.000000e+00 : f32
    %54 = vector.shape_cast %11 : vector<1x256xi1> to vector<1x256xi1>
    %55 = vector.broadcast %54 : vector<1x256xi1> to vector<2x256xi1>
    %56 = vector.broadcast %cst_14 : f32 to vector<2x256xf32>
    %57 = arith.select %55, %53, %56 : vector<2x256xi1>, vector<2x256xf32>
    %c2 = arith.constant 2 : index
    %58 = memref.load %arg0[%c2] : memref<18xf32, #tpu.memory_space<smem>>
    %59 = vector.broadcast %58 : f32 to vector<2x256xf32>
    %60 = arith.mulf %57, %59 : vector<2x256xf32>
    %61 = arith.addf %48, %60 : vector<2x256xf32>
    %c11 = arith.constant 11 : index
    %62 = memref.load %arg0[%c11] : memref<18xf32, #tpu.memory_space<smem>>
    %63 = vector.broadcast %62 : f32 to vector<2x256xf32>
    %64 = arith.mulf %57, %63 : vector<2x256xf32>
    %65 = arith.addf %52, %64 : vector<2x256xf32>
    %66 = vector.extract_strided_slice %26 {offsets = [0, 127], sizes = [2, 256], strides = [1, 1]} : vector<2x512xf32> to vector<2x256xf32>
    %cst_15 = arith.constant 0.000000e+00 : f32
    %67 = vector.shape_cast %3 : vector<1x256xi1> to vector<1x256xi1>
    %68 = vector.broadcast %67 : vector<1x256xi1> to vector<2x256xi1>
    %69 = vector.broadcast %cst_15 : f32 to vector<2x256xf32>
    %70 = arith.select %68, %66, %69 : vector<2x256xi1>, vector<2x256xf32>
    %c3 = arith.constant 3 : index
    %71 = memref.load %arg0[%c3] : memref<18xf32, #tpu.memory_space<smem>>
    %72 = vector.broadcast %71 : f32 to vector<2x256xf32>
    %73 = arith.mulf %70, %72 : vector<2x256xf32>
    %74 = arith.addf %61, %73 : vector<2x256xf32>
    %c12 = arith.constant 12 : index
    %75 = memref.load %arg0[%c12] : memref<18xf32, #tpu.memory_space<smem>>
    %76 = vector.broadcast %75 : f32 to vector<2x256xf32>
    %77 = arith.mulf %70, %76 : vector<2x256xf32>
    %78 = arith.addf %65, %77 : vector<2x256xf32>
    %79 = vector.extract_strided_slice %26 {offsets = [0, 128], sizes = [2, 256], strides = [1, 1]} : vector<2x512xf32> to vector<2x256xf32>
    %c4 = arith.constant 4 : index
    %80 = memref.load %arg0[%c4] : memref<18xf32, #tpu.memory_space<smem>>
    %81 = vector.broadcast %80 : f32 to vector<2x256xf32>
    %82 = arith.mulf %79, %81 : vector<2x256xf32>
    %83 = arith.addf %74, %82 : vector<2x256xf32>
    %c13 = arith.constant 13 : index
    %84 = memref.load %arg0[%c13] : memref<18xf32, #tpu.memory_space<smem>>
    %85 = vector.broadcast %84 : f32 to vector<2x256xf32>
    %86 = arith.mulf %79, %85 : vector<2x256xf32>
    %87 = arith.addf %78, %86 : vector<2x256xf32>
    %88 = vector.extract_strided_slice %26 {offsets = [0, 129], sizes = [2, 256], strides = [1, 1]} : vector<2x512xf32> to vector<2x256xf32>
    %cst_16 = arith.constant 0.000000e+00 : f32
    %89 = vector.shape_cast %5 : vector<1x256xi1> to vector<1x256xi1>
    %90 = vector.broadcast %89 : vector<1x256xi1> to vector<2x256xi1>
    %91 = vector.broadcast %cst_16 : f32 to vector<2x256xf32>
    %92 = arith.select %90, %88, %91 : vector<2x256xi1>, vector<2x256xf32>
    %c5 = arith.constant 5 : index
    %93 = memref.load %arg0[%c5] : memref<18xf32, #tpu.memory_space<smem>>
    %94 = vector.broadcast %93 : f32 to vector<2x256xf32>
    %95 = arith.mulf %92, %94 : vector<2x256xf32>
    %96 = arith.addf %83, %95 : vector<2x256xf32>
    %c14 = arith.constant 14 : index
    %97 = memref.load %arg0[%c14] : memref<18xf32, #tpu.memory_space<smem>>
    %98 = vector.broadcast %97 : f32 to vector<2x256xf32>
    %99 = arith.mulf %92, %98 : vector<2x256xf32>
    %100 = arith.addf %87, %99 : vector<2x256xf32>
    %101 = vector.extract_strided_slice %26 {offsets = [0, 143], sizes = [2, 256], strides = [1, 1]} : vector<2x512xf32> to vector<2x256xf32>
    %cst_17 = arith.constant 0.000000e+00 : f32
    %102 = vector.shape_cast %12 : vector<1x256xi1> to vector<1x256xi1>
    %103 = vector.broadcast %102 : vector<1x256xi1> to vector<2x256xi1>
    %104 = vector.broadcast %cst_17 : f32 to vector<2x256xf32>
    %105 = arith.select %103, %101, %104 : vector<2x256xi1>, vector<2x256xf32>
    %c6 = arith.constant 6 : index
    %106 = memref.load %arg0[%c6] : memref<18xf32, #tpu.memory_space<smem>>
    %107 = vector.broadcast %106 : f32 to vector<2x256xf32>
    %108 = arith.mulf %105, %107 : vector<2x256xf32>
    %109 = arith.addf %96, %108 : vector<2x256xf32>
    %c15 = arith.constant 15 : index
    %110 = memref.load %arg0[%c15] : memref<18xf32, #tpu.memory_space<smem>>
    %111 = vector.broadcast %110 : f32 to vector<2x256xf32>
    %112 = arith.mulf %105, %111 : vector<2x256xf32>
    %113 = arith.addf %100, %112 : vector<2x256xf32>
    %114 = vector.extract_strided_slice %26 {offsets = [0, 144], sizes = [2, 256], strides = [1, 1]} : vector<2x512xf32> to vector<2x256xf32>
    %cst_18 = arith.constant 0.000000e+00 : f32
    %115 = vector.shape_cast %9 : vector<1x256xi1> to vector<1x256xi1>
    %116 = vector.broadcast %115 : vector<1x256xi1> to vector<2x256xi1>
    %117 = vector.broadcast %cst_18 : f32 to vector<2x256xf32>
    %118 = arith.select %116, %114, %117 : vector<2x256xi1>, vector<2x256xf32>
    %c7 = arith.constant 7 : index
    %119 = memref.load %arg0[%c7] : memref<18xf32, #tpu.memory_space<smem>>
    %120 = vector.broadcast %119 : f32 to vector<2x256xf32>
    %121 = arith.mulf %118, %120 : vector<2x256xf32>
    %122 = arith.addf %109, %121 : vector<2x256xf32>
    %c16 = arith.constant 16 : index
    %123 = memref.load %arg0[%c16] : memref<18xf32, #tpu.memory_space<smem>>
    %124 = vector.broadcast %123 : f32 to vector<2x256xf32>
    %125 = arith.mulf %118, %124 : vector<2x256xf32>
    %126 = arith.addf %113, %125 : vector<2x256xf32>
    %127 = vector.extract_strided_slice %26 {offsets = [0, 145], sizes = [2, 256], strides = [1, 1]} : vector<2x512xf32> to vector<2x256xf32>
    %cst_19 = arith.constant 0.000000e+00 : f32
    %128 = vector.shape_cast %13 : vector<1x256xi1> to vector<1x256xi1>
    %129 = vector.broadcast %128 : vector<1x256xi1> to vector<2x256xi1>
    %130 = vector.broadcast %cst_19 : f32 to vector<2x256xf32>
    %131 = arith.select %129, %127, %130 : vector<2x256xi1>, vector<2x256xf32>
    %c8 = arith.constant 8 : index
    %132 = memref.load %arg0[%c8] : memref<18xf32, #tpu.memory_space<smem>>
    %133 = vector.broadcast %132 : f32 to vector<2x256xf32>
    %134 = arith.mulf %131, %133 : vector<2x256xf32>
    %135 = arith.addf %122, %134 : vector<2x256xf32>
    %c17 = arith.constant 17 : index
    %136 = memref.load %arg0[%c17] : memref<18xf32, #tpu.memory_space<smem>>
    %137 = vector.broadcast %136 : f32 to vector<2x256xf32>
    %138 = arith.mulf %131, %137 : vector<2x256xf32>
    %139 = arith.addf %126, %138 : vector<2x256xf32>
    %c0_20 = arith.constant 0 : index
    %140 = memref.load %arg2[%c0_20] : memref<2xf32, #tpu.memory_space<smem>>
    %c1_21 = arith.constant 1 : index
    %141 = memref.load %arg2[%c1_21] : memref<2xf32, #tpu.memory_space<smem>>
    %142 = vector.broadcast %140 : f32 to vector<2x256xf32>
    %143 = arith.mulf %135, %142 : vector<2x256xf32>
    %144 = vector.broadcast %141 : f32 to vector<2x256xf32>
    %145 = arith.mulf %139, %144 : vector<2x256xf32>
    %146 = vector.extract_strided_slice %15 {offsets = [0, 0, 0], sizes = [2, 1, 256], strides = [1, 1, 1]} : vector<2x2x256xf32> to vector<2x1x256xf32>
    %147 = vector.shape_cast %146 : vector<2x1x256xf32> to vector<2x256xf32>
    %148 = vector.extract_strided_slice %15 {offsets = [0, 1, 0], sizes = [2, 1, 256], strides = [1, 1, 1]} : vector<2x2x256xf32> to vector<2x1x256xf32>
    %149 = vector.shape_cast %148 : vector<2x1x256xf32> to vector<2x256xf32>
    %150 = vector.broadcast %140 : f32 to vector<2x256xf32>
    %151 = arith.mulf %147, %150 : vector<2x256xf32>
    %152 = arith.subf %143, %151 : vector<2x256xf32>
    %153 = vector.broadcast %141 : f32 to vector<2x256xf32>
    %154 = arith.mulf %149, %153 : vector<2x256xf32>
    %155 = arith.subf %145, %154 : vector<2x256xf32>
    %156 = arith.mulf %152, %152 : vector<2x256xf32>
    %157 = vector.shape_cast %156 : vector<2x256xf32> to vector<1x2x256xf32>
    %cst_22 = arith.constant dense<0.000000e+00> : vector<1xf32>
    %158 = vector.multi_reduction <add>, %157, %cst_22 [1, 2] : vector<1x2x256xf32> to vector<1xf32>
    %159 = vector.shape_cast %158 : vector<1xf32> to vector<1x1x1xf32>
    %160 = vector.extract %159[0, 0, 0] : f32 from vector<1x1x1xf32>
    %161 = vector.broadcast %160 : f32 to vector<1x1xf32>
    %162 = arith.mulf %155, %155 : vector<2x256xf32>
    %163 = vector.shape_cast %162 : vector<2x256xf32> to vector<1x2x256xf32>
    %cst_23 = arith.constant dense<0.000000e+00> : vector<1xf32>
    %164 = vector.multi_reduction <add>, %163, %cst_23 [1, 2] : vector<1x2x256xf32> to vector<1xf32>
    %165 = vector.shape_cast %164 : vector<1xf32> to vector<1x1x1xf32>
    %166 = vector.extract %165[0, 0, 0] : f32 from vector<1x1x1xf32>
    %167 = vector.broadcast %166 : f32 to vector<1x1xf32>
    %168 = arith.addf %161, %167 : vector<1x1xf32>
    %cst_24 = arith.constant 9.765625E-4 : f32
    %169 = vector.broadcast %cst_24 : f32 to vector<1x1xf32>
    %170 = arith.mulf %168, %169 : vector<1x1xf32>
    %171 = tpu.concatenate %143, %24 in 1 : vector<2x256xf32>, vector<2x128xf32> -> vector<2x384xf32>
    %172 = tpu.concatenate %147, %24 in 1 : vector<2x256xf32>, vector<2x128xf32> -> vector<2x384xf32>
    %173 = vector.extract_strided_slice %171 {offsets = [0, 1], sizes = [2, 256], strides = [1, 1]} : vector<2x384xf32> to vector<2x256xf32>
    %174 = arith.subf %173, %143 : vector<2x256xf32>
    %175 = vector.extract_strided_slice %172 {offsets = [0, 1], sizes = [2, 256], strides = [1, 1]} : vector<2x384xf32> to vector<2x256xf32>
    %176 = arith.subf %175, %147 : vector<2x256xf32>
    %177 = arith.subf %174, %176 : vector<2x256xf32>
    %cst_25 = arith.constant 0.000000e+00 : f32
    %178 = vector.shape_cast %5 : vector<1x256xi1> to vector<1x256xi1>
    %179 = vector.broadcast %178 : vector<1x256xi1> to vector<2x256xi1>
    %180 = vector.broadcast %cst_25 : f32 to vector<2x256xf32>
    %181 = arith.select %179, %177, %180 : vector<2x256xi1>, vector<2x256xf32>
    %182 = vector.extract_strided_slice %171 {offsets = [0, 16], sizes = [2, 256], strides = [1, 1]} : vector<2x384xf32> to vector<2x256xf32>
    %183 = arith.subf %182, %143 : vector<2x256xf32>
    %184 = vector.extract_strided_slice %172 {offsets = [0, 16], sizes = [2, 256], strides = [1, 1]} : vector<2x384xf32> to vector<2x256xf32>
    %185 = arith.subf %184, %147 : vector<2x256xf32>
    %186 = arith.subf %183, %185 : vector<2x256xf32>
    %cst_26 = arith.constant 0.000000e+00 : f32
    %187 = vector.shape_cast %9 : vector<1x256xi1> to vector<1x256xi1>
    %188 = vector.broadcast %187 : vector<1x256xi1> to vector<2x256xi1>
    %189 = vector.broadcast %cst_26 : f32 to vector<2x256xf32>
    %190 = arith.select %188, %186, %189 : vector<2x256xi1>, vector<2x256xf32>
    %191 = arith.mulf %181, %181 : vector<2x256xf32>
    %192 = vector.shape_cast %191 : vector<2x256xf32> to vector<1x2x256xf32>
    %cst_27 = arith.constant dense<0.000000e+00> : vector<1xf32>
    %193 = vector.multi_reduction <add>, %192, %cst_27 [1, 2] : vector<1x2x256xf32> to vector<1xf32>
    %194 = vector.shape_cast %193 : vector<1xf32> to vector<1x1x1xf32>
    %195 = vector.extract %194[0, 0, 0] : f32 from vector<1x1x1xf32>
    %196 = vector.broadcast %195 : f32 to vector<1x1xf32>
    %cst_28 = arith.constant 0.00208333344 : f32
    %197 = vector.broadcast %cst_28 : f32 to vector<1x1xf32>
    %198 = arith.mulf %196, %197 : vector<1x1xf32>
    %199 = arith.mulf %190, %190 : vector<2x256xf32>
    %200 = vector.shape_cast %199 : vector<2x256xf32> to vector<1x2x256xf32>
    %cst_29 = arith.constant dense<0.000000e+00> : vector<1xf32>
    %201 = vector.multi_reduction <add>, %200, %cst_29 [1, 2] : vector<1x2x256xf32> to vector<1xf32>
    %202 = vector.shape_cast %201 : vector<1xf32> to vector<1x1x1xf32>
    %203 = vector.extract %202[0, 0, 0] : f32 from vector<1x1x1xf32>
    %204 = vector.broadcast %203 : f32 to vector<1x1xf32>
    %cst_30 = arith.constant 0.00208333344 : f32
    %205 = vector.broadcast %cst_30 : f32 to vector<1x1xf32>
    %206 = arith.mulf %204, %205 : vector<1x1xf32>
    %207 = arith.addf %198, %206 : vector<1x1xf32>
    %cst_31 = arith.constant 9.000000e-02 : f32
    %208 = vector.broadcast %cst_31 : f32 to vector<1x1xf32>
    %209 = arith.mulf %207, %208 : vector<1x1xf32>
    %210 = arith.addf %170, %209 : vector<1x1xf32>
    %211 = math.absf %152 : vector<2x256xf32>
    %212 = vector.shape_cast %211 : vector<2x256xf32> to vector<1x2x256xf32>
    %cst_32 = arith.constant dense<0.000000e+00> : vector<1xf32>
    %213 = vector.multi_reduction <add>, %212, %cst_32 [1, 2] : vector<1x2x256xf32> to vector<1xf32>
    %214 = vector.shape_cast %213 : vector<1xf32> to vector<1x1x1xf32>
    %215 = vector.extract %214[0, 0, 0] : f32 from vector<1x1x1xf32>
    %216 = vector.broadcast %215 : f32 to vector<1x1xf32>
    %217 = vector.broadcast %140 : f32 to vector<1x1xf32>
    %218 = arith.divf %216, %217 : vector<1x1xf32>
    %cst_33 = arith.constant 9.765625E-4 : f32
    %219 = vector.broadcast %cst_33 : f32 to vector<1x1xf32>
    %220 = arith.mulf %218, %219 : vector<1x1xf32>
    %221 = math.absf %155 : vector<2x256xf32>
    %222 = vector.shape_cast %221 : vector<2x256xf32> to vector<1x2x256xf32>
    %cst_34 = arith.constant dense<0.000000e+00> : vector<1xf32>
    %223 = vector.multi_reduction <add>, %222, %cst_34 [1, 2] : vector<1x2x256xf32> to vector<1xf32>
    %224 = vector.shape_cast %223 : vector<1xf32> to vector<1x1x1xf32>
    %225 = vector.extract %224[0, 0, 0] : f32 from vector<1x1x1xf32>
    %226 = vector.broadcast %225 : f32 to vector<1x1xf32>
    %227 = vector.broadcast %141 : f32 to vector<1x1xf32>
    %228 = arith.divf %226, %227 : vector<1x1xf32>
    %cst_35 = arith.constant 9.765625E-4 : f32
    %229 = vector.broadcast %cst_35 : f32 to vector<1x1xf32>
    %230 = arith.mulf %228, %229 : vector<1x1xf32>
    %231 = tpu.iota {dimensions = array<i32: 1>} : vector<1x128xi32>
    %c0_i32 = arith.constant 0 : i32
    %232 = vector.broadcast %c0_i32 : i32 to vector<1x128xi32>
    %233 = arith.cmpi eq, %231, %232 : vector<1x128xi32>
    %cst_36 = arith.constant 0.000000e+00 : f32
    %234 = vector.shape_cast %210 : vector<1x1xf32> to vector<1x1xf32>
    %235 = vector.broadcast %234 : vector<1x1xf32> to vector<1x128xf32>
    %236 = vector.broadcast %cst_36 : f32 to vector<1x128xf32>
    %237 = arith.select %233, %235, %236 : vector<1x128xi1>, vector<1x128xf32>
    %c1_i32_37 = arith.constant 1 : i32
    %238 = vector.broadcast %c1_i32_37 : i32 to vector<1x128xi32>
    %239 = arith.cmpi eq, %231, %238 : vector<1x128xi32>
    %240 = vector.shape_cast %220 : vector<1x1xf32> to vector<1x1xf32>
    %241 = vector.broadcast %240 : vector<1x1xf32> to vector<1x128xf32>
    %242 = arith.select %239, %241, %237 : vector<1x128xi1>, vector<1x128xf32>
    %c2_i32 = arith.constant 2 : i32
    %243 = vector.broadcast %c2_i32 : i32 to vector<1x128xi32>
    %244 = arith.cmpi eq, %231, %243 : vector<1x128xi32>
    %245 = vector.shape_cast %230 : vector<1x1xf32> to vector<1x1xf32>
    %246 = vector.broadcast %245 : vector<1x1xf32> to vector<1x128xf32>
    %247 = arith.select %244, %246, %242 : vector<1x128xi1>, vector<1x128xf32>
    %c0_38 = arith.constant 0 : index
    %c0_39 = arith.constant 0 : index
    %248 = vector.load %arg6[%c0_38, %c0_39] : memref<1x128xf32, #tpu.memory_space<vmem>>, vector<1x128xf32>
    tpu.vector_store %arg6[%c0_38, %c0_39], %247 {strides = array<i32>} : memref<1x128xf32, #tpu.memory_space<vmem>>, vector<1x128xf32>,
    return
  }
}

</mosaic_0001>

<llo_original>
// kernel: _score_regression_fused.1
$region0: #{_score_regression_fused.1}
  #allocation0 [shape = 'u32[]', space=smem, size = 0x4, offset = 0x4, fixed_abs, tag = 'smem constant byte address 0x4 - core index']
  #allocation1 [shape = 'u32[144,128]{1,0:T(1,128)}', space=vmem, size = 0x12000, scoped, tag = 'internal scratch']
  %s0 = inlined_call_operand.vmem [shape: f32[18], index: 0, kind: input, shape index: {}]
  %s1 = inlined_call_operand.vmem [shape: f32[2], index: 1, kind: input, shape index: {}]
  %s2 = inlined_call_operand.vmem [shape: f32[2], index: 2, kind: input, shape index: {}]
  %s3 = inlined_call_operand.vmem [shape: s32[1,256], index: 3, kind: input, shape index: {}]
  %s4 = inlined_call_operand.vmem [shape: f32[2,1,256], index: 4, kind: input, shape index: {}]
  %s5 = inlined_call_operand.vmem [shape: f32[2,2,256], index: 5, kind: input, shape index: {}]
  %s6 = inlined_call_operand.vmem [shape: f32[1,128], index: 6, kind: output, shape index: {}]
  %s7 = sld [smem:[#allocation0]]
  $region46: #{_score_regression_fused.1} parent=0
    _
  %s9 = ssub.s32 1, %s7
  %s10 = scalar_select 0, %s9, %s7
  $region1: #{_score_regression_fused.1} parent=0
    #allocation2 [shape = 'u8[512]{0}', space=smem, size = 0x200, scoped, tag = 'input window, operand 0, single buffered']
    #allocation3 [shape = 's32[1]{0}', space=sflag, size = 0x4, scoped, tag = 'scoped memory for _score_regression_fused.1']
    #allocation4 [shape = 'u8[512]{0}', space=smem, size = 0x200, scoped, tag = 'input window, operand 1, single buffered']
    #allocation5 [shape = 's32[1]{0}', space=sflag, size = 0x4, scoped, tag = 'scoped memory for _score_regression_fused.1']
    #allocation6 [shape = 'u8[512]{0}', space=smem, size = 0x200, scoped, tag = 'input window, operand 2, single buffered']
    %11 = vsyncpa [#allocation3], 0
    %12 = vsyncpa [#allocation5], 0
    // Predicated region
    $region2: #{_score_regression_fused.1} parent=1 // pred_check
      _
    $region3: #{_score_regression_fused.1} parent=1 // pred_check_branch
      %14 = sbr.rel (0) target = $region5
    $region4: #{_score_regression_fused.1} parent=1 // pred_region
      %s16 = ssub.s32 16, 16
      %17 = vsyncadd [#allocation3], %s16
      %s19 = sshll.u32 %s0, 4
      %s20 = int_to_ptr.vmem [resolvable:$true] %s19
      %22 = dma.vmem_to_smem %s20, 16, [#allocation2], [#allocation3]
    $region5: #{_score_regression_fused.1} parent=1 // pred_fallthru
      _
    // Predicated region
    $region6: #{_score_regression_fused.1} parent=1 // pred_check
      _
    $region7: #{_score_regression_fused.1} parent=1 // pred_check_branch
      %24 = sbr.rel (0) target = $region9
    $region8: #{_score_regression_fused.1} parent=1 // pred_region
      %s26 = ssub.s32 16, 16
      %27 = vsyncadd [#allocation5], %s26
      %s29 = sshll.u32 %s1, 4
      %s30 = int_to_ptr.vmem [resolvable:$true] %s29
      %32 = dma.vmem_to_smem %s30, 16, [#allocation4], [#allocation5]
    $region9: #{_score_regression_fused.1} parent=1 // pred_fallthru
      _
    // Predicated region
    $region10: #{_score_regression_fused.1} parent=1 // pred_check
      _
    $region11: #{_score_regression_fused.1} parent=1 // pred_check_branch
      %34 = sbr.rel (0) target = $region13
    $region12: #{_score_regression_fused.1} parent=1 // pred_region
      %s36 = ssub.s32 16, 16
      %37 = vsyncadd [#allocation5], %s36
      %s39 = sshll.u32 %s2, 4
      %s40 = int_to_ptr.vmem [resolvable:$true] %s39
      %42 = dma.vmem_to_smem %s40, 16, [#allocation6], [#allocation5]
    $region13: #{_score_regression_fused.1} parent=1 // pred_fallthru
      _
    // Predicated region
    $region14: #{_score_regression_fused.1} parent=1 // pred_check
      _
    $region15: #{_score_regression_fused.1} parent=1 // pred_check_branch
      %44 = sbr.rel (0) target = $region17
    $region16: #{_score_regression_fused.1} parent=1 // pred_region
      _
    $region17: #{_score_regression_fused.1} parent=1 // pred_fallthru
      _
    // Predicated region
    $region18: #{_score_regression_fused.1} parent=1 // pred_check
      _
    $region19: #{_score_regression_fused.1} parent=1 // pred_check_branch
      %46 = sbr.rel (0) target = $region21
    $region20: #{_score_regression_fused.1} parent=1 // pred_region
      _
    $region21: #{_score_regression_fused.1} parent=1 // pred_fallthru
      _
    // Predicated region
    $region22: #{_score_regression_fused.1} parent=1 // pred_check
      _
    $region23: #{_score_regression_fused.1} parent=1 // pred_check_branch
      %48 = sbr.rel (0) target = $region25
    $region24: #{_score_regression_fused.1} parent=1 // pred_region
      _
    $region25: #{_score_regression_fused.1} parent=1 // pred_fallthru
      _
    // Predicated region
    $region26: #{_score_regression_fused.1} parent=1 // pred_check
      _
    $region27: #{_score_regression_fused.1} parent=1 // pred_check_branch
      %50 = sbr.rel (0) target = $region29
    $region28: #{_score_regression_fused.1} parent=1 // pred_region
      %51 = dma.done [#allocation3], 16
    $region29: #{_score_regression_fused.1} parent=1 // pred_fallthru
      _
    // Predicated region
    $region30: #{_score_regression_fused.1} parent=1 // pred_check
      _
    $region31: #{_score_regression_fused.1} parent=1 // pred_check_branch
      %53 = sbr.rel (0) target = $region33
    $region32: #{_score_regression_fused.1} parent=1 // pred_region
      %54 = dma.done [#allocation5], 16
    $region33: #{_score_regression_fused.1} parent=1 // pred_fallthru
      _
    // Predicated region
    $region34: #{_score_regression_fused.1} parent=1 // pred_check
      _
    $region35: #{_score_regression_fused.1} parent=1 // pred_check_branch
      %56 = sbr.rel (0) target = $region37
    $region36: #{_score_regression_fused.1} parent=1 // pred_region
      %57 = dma.done [#allocation5], 16
    $region37: #{_score_regression_fused.1} parent=1 // pred_fallthru
      _
    %58 = sfence
    %v59 = vlaneseq
    %v60 = vand.u32 %v59, 127
    %v61 = vadd.s32 %v60, 128
    %v62 = vld [vmem:[%s3] sm:$0x3]
    %vm63 = vcmp.ge.s32.totalorder %v62, 1
    %vm64 = vcmp.lt.s32.totalorder %v62, 15
    %vm65 = vcmp.ge.s32.totalorder %v60, 16
    %vm66 = vcmp.ge.s32.totalorder %v61, 16
    %vm67 = vcmp.lt.s32.totalorder %v60, 240
    %vm68 = vcmp.lt.s32.totalorder %v61, 240
    %v69 = vsel %vm63, 1, 0
    %v70 = vlaneseq
    %v71 = vshrl.u32 %v70, 7
    %v72 = vsub.s32 0, %v71
    %v73 = vrot.slane %v69, %v72
    %v74 = vlaneseq
    %v75 = vshrl.u32 %v74, 7
    %v76 = vsub.s32 1, %v75
    %v77 = vrot.slane %v69, %v76
    %vm78 = vcmp.ne.s32.totalorder %v73, 0
    %vm79 = vcmp.ne.s32.totalorder %v77, 0
    %vm80 = vmand %vm65, %vm78
    %vm81 = vmand %vm66, %vm79
    %v82 = vsel %vm64, 1, 0
    %v83 = vlaneseq
    %v84 = vshrl.u32 %v83, 7
    %v85 = vsub.s32 0, %v84
    %v86 = vrot.slane %v82, %v85
    %v87 = vlaneseq
    %v88 = vshrl.u32 %v87, 7
    %v89 = vsub.s32 1, %v88
    %v90 = vrot.slane %v82, %v89
    %vm91 = vcmp.ne.s32.totalorder %v86, 0
    %vm92 = vcmp.ne.s32.totalorder %v90, 0
    %vm93 = vmand %vm65, %vm91
    %vm94 = vmand %vm66, %vm92
    %vm95 = vmand %vm67, %vm78
    %vm96 = vmand %vm68, %vm79
    %vm97 = vmand %vm67, %vm91
    %vm98 = vmand %vm68, %vm92
    %v99 = vld [vmem:[%s4] sm:$0x3]
    %v100 = vld [vmem:[%s4 + $0x2] sm:$0x3]
    %v101 = vld [vmem:[%s5] sm:$0xf]
    %v102 = vld [vmem:[%s5 + $0x4] sm:$0xf]
    %s103 = sld [smem:[#allocation4]]
    %v104 = vstv %s103
    %v105 = vadd.f32 %v104, 0.0
    %s106 = sld [smem:[#allocation4 + $0x1]]
    %v107 = vstv %s106
    %v108 = vadd.f32 %v107, 0.0
    %v111 = vcombine.low %v99, %v100
    %v113 = vunpack.c.l.s4 1966171168
    %v114 = vunpack.c.0.s8 %v113
    %v115 = vlaneseq
    %v116 = vshrl.u32 %v115, 7
    %v117 = vsub.s32 %v114, %v116
    %v118 = vrot.slane %v111, %v117
    %v119 = vcombine.high %v118, %v118
    %v121 = vunpack.c.l.s4 1966171168
    %v122 = vunpack.c.0.s8 %v121
    %v123 = vlaneseq
    %v124 = vshrl.u32 %v123, 7
    %v125 = vsub.s32 %v122, %v124
    %v126 = vrot.slane %v118, %v125
    %v128 = vunpack.c.l.s4 1966171168
    %v129 = vunpack.c.0.s8 %v128
    %v130 = vlaneseq
    %v131 = vshrl.u32 %v130, 7
    %v132 = vsub.s32 %v129, %v131
    %v133 = vrot.slane %v119, %v132
    %v136 = vsel %vm80, 1, 0
    %v137 = vsel %vm81, 1, 0
    %v138 = vlaneseq
    %v139 = vshrl.u32 %v138, 7
    %v140 = vsub.s32 0, %v139
    %v141 = vrot.slane %v136, %v140
    %v142 = vlaneseq
    %v143 = vshrl.u32 %v142, 7
    %v144 = vsub.s32 0, %v143
    %v145 = vrot.slane %v137, %v144
    %vm146 = vcmp.eq.s32.totalorder %v141, 1
    %vm147 = vcmp.eq.s32.totalorder %v145, 1
    %149 = vrot.lane.b32.xlu0 0.0, 17
    %v150 = vpop.permute.xlu0 %149
    %151 = vrot.lane.b32.xlu0 %v126, 17
    %v152 = vpop.permute.xlu0 %151
    %153 = vrot.lane.b32.xlu0 %v133, 17
    %v154 = vpop.permute.xlu0 %153
    %vm155 = vcmask 138240
    %v156 = vsel %vm155, %v150, %v152
    %v157 = vsel %vm155, %v152, %v154
    %v160 = vsel %vm146, %v156, 0.0
    %v161 = vsel %vm147, %v157, 0.0
    %s162 = sld [smem:[#allocation2]]
    %v163 = vstv %s162
    %v164 = vmul.f32 %v160, %v163
    %v165 = vmul.f32 %v161, %v163
    %v166 = vadd.f32 %v105, %v164
    %v167 = vadd.f32 %v105, %v165
    %s168 = sld [smem:[#allocation2 + $0x9]]
    %v169 = vstv %s168
    %v170 = vmul.f32 %v160, %v169
    %v171 = vmul.f32 %v161, %v169
    %v172 = vadd.f32 %v108, %v170
    %v173 = vadd.f32 %v108, %v171
    %v174 = vsel %vm65, 1, 0
    %v175 = vsel %vm66, 1, 0
    %vm176 = vcmp.eq.s32.totalorder %v174, 1
    %vm177 = vcmp.eq.s32.totalorder %v175, 1
    %178 = vrot.lane.b32.xlu0 0.0, 16
    %v179 = vpop.permute.xlu0 %178
    %180 = vrot.lane.b32.xlu0 %v126, 16
    %v181 = vpop.permute.xlu0 %180
    %182 = vrot.lane.b32.xlu0 %v133, 16
    %v183 = vpop.permute.xlu0 %182
    %vm184 = vcmask 130048
    %v185 = vsel %vm184, %v179, %v181
    %v186 = vsel %vm184, %v181, %v183
    %v189 = vsel %vm176, %v185, 0.0
    %v190 = vsel %vm177, %v186, 0.0
    %s191 = sld [smem:[#allocation2 + $0x1]]
    %v192 = vstv %s191
    %v193 = vmul.f32 %v189, %v192
    %v194 = vmul.f32 %v190, %v192
    %v195 = vadd.f32 %v166, %v193
    %v196 = vadd.f32 %v167, %v194
    %s197 = sld [smem:[#allocation2 + $0xa]]
    %v198 = vstv %s197
    %v199 = vmul.f32 %v189, %v198
    %v200 = vmul.f32 %v190, %v198
    %v201 = vadd.f32 %v172, %v199
    %v202 = vadd.f32 %v173, %v200
    %v203 = vsel %vm93, 1, 0
    %v204 = vsel %vm94, 1, 0
    %v205 = vlaneseq
    %v206 = vshrl.u32 %v205, 7
    %v207 = vsub.s32 0, %v206
    %v208 = vrot.slane %v203, %v207
    %v209 = vlaneseq
    %v210 = vshrl.u32 %v209, 7
    %v211 = vsub.s32 0, %v210
    %v212 = vrot.slane %v204, %v211
    %vm213 = vcmp.eq.s32.totalorder %v208, 1
    %vm214 = vcmp.eq.s32.totalorder %v212, 1
    %215 = vrot.lane.b32.xlu0 0.0, 15
    %v216 = vpop.permute.xlu0 %215
    %217 = vrot.lane.b32.xlu0 %v126, 15
    %v218 = vpop.permute.xlu0 %217
    %219 = vrot.lane.b32.xlu0 %v133, 15
    %v220 = vpop.permute.xlu0 %219
    %vm221 = vcmask 121856
    %v222 = vsel %vm221, %v216, %v218
    %v223 = vsel %vm221, %v218, %v220
    %v226 = vsel %vm213, %v222, 0.0
    %v227 = vsel %vm214, %v223, 0.0
    %s228 = sld [smem:[#allocation2 + $0x2]]
    %v229 = vstv %s228
    %v230 = vmul.f32 %v226, %v229
    %v231 = vmul.f32 %v227, %v229
    %v232 = vadd.f32 %v195, %v230
    %v233 = vadd.f32 %v196, %v231
    %s234 = sld [smem:[#allocation2 + $0xb]]
    %v235 = vstv %s234
    %v236 = vmul.f32 %v226, %v235
    %v237 = vmul.f32 %v227, %v235
    %v238 = vadd.f32 %v201, %v236
    %v239 = vadd.f32 %v202, %v237
    %vm240 = vcmp.eq.s32.totalorder %v73, 1
    %vm241 = vcmp.eq.s32.totalorder %v77, 1
    %242 = vrot.lane.b32.xlu0 0.0, 1
    %v243 = vpop.permute.xlu0 %242
    %244 = vrot.lane.b32.xlu0 %v126, 1
    %v245 = vpop.permute.xlu0 %244
    %246 = vrot.lane.b32.xlu0 %v133, 1
    %v247 = vpop.permute.xlu0 %246
    %vm248 = vcmask 7168
    %v249 = vsel %vm248, %v243, %v245
    %v250 = vsel %vm248, %v245, %v247
    %v253 = vsel %vm240, %v249, 0.0
    %v254 = vsel %vm241, %v250, 0.0
    %s255 = sld [smem:[#allocation2 + $0x3]]
    %v256 = vstv %s255
    %v257 = vmul.f32 %v253, %v256
    %v258 = vmul.f32 %v254, %v256
    %v259 = vadd.f32 %v232, %v257
    %v260 = vadd.f32 %v233, %v258
    %s261 = sld [smem:[#allocation2 + $0xc]]
    %v262 = vstv %s261
    %v263 = vmul.f32 %v253, %v262
    %v264 = vmul.f32 %v254, %v262
    %v265 = vadd.f32 %v238, %v263
    %v266 = vadd.f32 %v239, %v264
    %s267 = sld [smem:[#allocation2 + $0x4]]
    %v268 = vstv %s267
    %v269 = vmul.f32 %v126, %v268
    %v270 = vmul.f32 %v133, %v268
    %v271 = vadd.f32 %v259, %v269
    %v272 = vadd.f32 %v260, %v270
    %s273 = sld [smem:[#allocation2 + $0xd]]
    %v274 = vstv %s273
    %v275 = vmul.f32 %v126, %v274
    %v276 = vmul.f32 %v133, %v274
    %v277 = vadd.f32 %v265, %v275
    %v278 = vadd.f32 %v266, %v276
    %vm279 = vcmp.eq.s32.totalorder %v86, 1
    %vm280 = vcmp.eq.s32.totalorder %v90, 1
    %281 = vrot.lane.b32.xlu0 %v126, 127
    %v282 = vpop.permute.xlu0 %281
    %283 = vrot.lane.b32.xlu0 %v133, 127
    %v284 = vpop.permute.xlu0 %283
    %285 = vrot.lane.b32.xlu0 0.0, 127
    %v286 = vpop.permute.xlu0 %285
    %vm287 = vcmask 1039360
    %v288 = vsel %vm287, %v282, %v284
    %v289 = vsel %vm287, %v284, %v286
    %v292 = vsel %vm279, %v288, 0.0
    %v293 = vsel %vm280, %v289, 0.0
    %s294 = sld [smem:[#allocation2 + $0x5]]
    %v295 = vstv %s294
    %v296 = vmul.f32 %v292, %v295
    %v297 = vmul.f32 %v293, %v295
    %v298 = vadd.f32 %v271, %v296
    %v299 = vadd.f32 %v272, %v297
    %s300 = sld [smem:[#allocation2 + $0xe]]
    %v301 = vstv %s300
    %v302 = vmul.f32 %v292, %v301
    %v303 = vmul.f32 %v293, %v301
    %v304 = vadd.f32 %v277, %v302
    %v305 = vadd.f32 %v278, %v303
    %v306 = vsel %vm95, 1, 0
    %v307 = vsel %vm96, 1, 0
    %v308 = vlaneseq
    %v309 = vshrl.u32 %v308, 7
    %v310 = vsub.s32 0, %v309
    %v311 = vrot.slane %v306, %v310
    %v312 = vlaneseq
    %v313 = vshrl.u32 %v312, 7
    %v314 = vsub.s32 0, %v313
    %v315 = vrot.slane %v307, %v314
    %vm316 = vcmp.eq.s32.totalorder %v311, 1
    %vm317 = vcmp.eq.s32.totalorder %v315, 1
    %318 = vrot.lane.b32.xlu0 %v126, 113
    %v319 = vpop.permute.xlu0 %318
    %320 = vrot.lane.b32.xlu0 %v133, 113
    %v321 = vpop.permute.xlu0 %320
    %322 = vrot.lane.b32.xlu0 0.0, 113
    %v323 = vpop.permute.xlu0 %322
    %vm324 = vcmask 924672
    %v325 = vsel %vm324, %v319, %v321
    %v326 = vsel %vm324, %v321, %v323
    %v329 = vsel %vm316, %v325, 0.0
    %v330 = vsel %vm317, %v326, 0.0
    %s331 = sld [smem:[#allocation2 + $0x6]]
    %v332 = vstv %s331
    %v333 = vmul.f32 %v329, %v332
    %v334 = vmul.f32 %v330, %v332
    %v335 = vadd.f32 %v298, %v333
    %v336 = vadd.f32 %v299, %v334
    %s337 = sld [smem:[#allocation2 + $0xf]]
    %v338 = vstv %s337
    %v339 = vmul.f32 %v329, %v338
    %v340 = vmul.f32 %v330, %v338
    %v341 = vadd.f32 %v304, %v339
    %v342 = vadd.f32 %v305, %v340
    %v343 = vsel %vm67, 1, 0
    %v344 = vsel %vm68, 1, 0
    %vm345 = vcmp.eq.s32.totalorder %v343, 1
    %vm346 = vcmp.eq.s32.totalorder %v344, 1
    %347 = vrot.lane.b32.xlu0 %v126, 112
    %v348 = vpop.permute.xlu0 %347
    %349 = vrot.lane.b32.xlu0 %v133, 112
    %v350 = vpop.permute.xlu0 %349
    %351 = vrot.lane.b32.xlu0 0.0, 112
    %v352 = vpop.permute.xlu0 %351
    %vm353 = vcmask 916480
    %v354 = vsel %vm353, %v348, %v350
    %v355 = vsel %vm353, %v350, %v352
    %v358 = vsel %vm345, %v354, 0.0
    %v359 = vsel %vm346, %v355, 0.0
    %s360 = sld [smem:[#allocation2 + $0x7]]
    %v361 = vstv %s360
    %v362 = vmul.f32 %v358, %v361
    %v363 = vmul.f32 %v359, %v361
    %v364 = vadd.f32 %v335, %v362
    %v365 = vadd.f32 %v336, %v363
    %s366 = sld [smem:[#allocation2 + $0x10]]
    %v367 = vstv %s366
    %v368 = vmul.f32 %v358, %v367
    %v369 = vmul.f32 %v359, %v367
    %v370 = vadd.f32 %v341, %v368
    %v371 = vadd.f32 %v342, %v369
    %v372 = vsel %vm97, 1, 0
    %v373 = vsel %vm98, 1, 0
    %v374 = vlaneseq
    %v375 = vshrl.u32 %v374, 7
    %v376 = vsub.s32 0, %v375
    %v377 = vrot.slane %v372, %v376
    %v378 = vlaneseq
    %v379 = vshrl.u32 %v378, 7
    %v380 = vsub.s32 0, %v379
    %v381 = vrot.slane %v373, %v380
    %vm382 = vcmp.eq.s32.totalorder %v377, 1
    %vm383 = vcmp.eq.s32.totalorder %v381, 1
    %384 = vrot.lane.b32.xlu0 %v126, 111
    %v385 = vpop.permute.xlu0 %384
    %386 = vrot.lane.b32.xlu0 %v133, 111
    %v387 = vpop.permute.xlu0 %386
    %388 = vrot.lane.b32.xlu0 0.0, 111
    %v389 = vpop.permute.xlu0 %388
    %vm390 = vcmask 908288
    %v391 = vsel %vm390, %v385, %v387
    %v392 = vsel %vm390, %v387, %v389
    %v395 = vsel %vm382, %v391, 0.0
    %v396 = vsel %vm383, %v392, 0.0
    %s397 = sld [smem:[#allocation2 + $0x8]]
    %v398 = vstv %s397
    %v399 = vmul.f32 %v395, %v398
    %v400 = vmul.f32 %v396, %v398
    %v401 = vadd.f32 %v364, %v399
    %v402 = vadd.f32 %v365, %v400
    %s403 = sld [smem:[#allocation2 + $0x11]]
    %v404 = vstv %s403
    %v405 = vmul.f32 %v395, %v404
    %v406 = vmul.f32 %v396, %v404
    %v407 = vadd.f32 %v370, %v405
    %v408 = vadd.f32 %v371, %v406
    %s409 = sld [smem:[#allocation6]]
    %s410 = sld [smem:[#allocation6 + $0x1]]
    %v411 = vstv %s409
    %v412 = vmul.f32 %v401, %v411
    %v413 = vmul.f32 %v402, %v411
    %v414 = vstv %s410
    %v415 = vmul.f32 %v407, %v414
    %v416 = vmul.f32 %v408, %v414
    %v417 = vmul.f32 %v101, %v411
    %v418 = vmul.f32 %v102, %v411
    %v421 = vlaneseq
    %v422 = vshrl.u32 %v421, 7
    %v423 = vsub.s32 0, %v422
    %v424 = vrot.slane %v417, %v423
    %v425 = vlaneseq
    %v426 = vshrl.u32 %v425, 7
    %v427 = vsub.s32 2, %v426
    %v428 = vrot.slane %v417, %v427
    %v429 = vlaneseq
    %v430 = vshrl.u32 %v429, 7
    %v431 = vsub.s32 0, %v430
    %v432 = vrot.slane %v418, %v431
    %v433 = vlaneseq
    %v434 = vshrl.u32 %v433, 7
    %v435 = vsub.s32 2, %v434
    %v436 = vrot.slane %v418, %v435
    %vm437 = vcmask 1041409
    %v438 = vsel %vm437, %v432, %v424
    %v439 = vsel %vm437, %v436, %v428
    %v442 = vsub.f32 %v412, %v438
    %v443 = vsub.f32 %v413, %v439
    %v444 = vmul.f32 %v101, %v414
    %v445 = vmul.f32 %v102, %v414
    %v448 = vlaneseq
    %v449 = vshrl.u32 %v448, 7
    %v450 = vsub.s32 1, %v449
    %v451 = vrot.slane %v444, %v450
    %v452 = vlaneseq
    %v453 = vshrl.u32 %v452, 7
    %v454 = vsub.s32 3, %v453
    %v455 = vrot.slane %v444, %v454
    %v456 = vlaneseq
    %v457 = vshrl.u32 %v456, 7
    %v458 = vsub.s32 1, %v457
    %v459 = vrot.slane %v445, %v458
    %v460 = vlaneseq
    %v461 = vshrl.u32 %v460, 7
    %v462 = vsub.s32 3, %v461
    %v463 = vrot.slane %v445, %v462
    %v464 = vsel %vm437, %v459, %v451
    %v465 = vsel %vm437, %v463, %v455
    %v468 = vsub.f32 %v415, %v464
    %v469 = vsub.f32 %v416, %v465
    %v470 = vmul.f32 %v442, %v442
    %v471 = vmul.f32 %v443, %v443
    %vm472 = vcmask 1041408
    %v473 = vsel %vm472, %v470, 0.0
    %v474 = vsel %vm472, %v471, 0.0
    %v475 = vadd.f32 %v473, %v474
    %476 = vadd.xlane.f32.xlu0 %v475
    %v477 = vpop.xlane.xlu0 %476
    %v478 = vrot.slane %v477, 4
    %v479 = vadd.f32 %v477, %v478
    %v480 = vrot.slane %v479, 2
    %v481 = vadd.f32 %v479, %v480
    %v482 = vrot.slane %v481, 1
    %v483 = vadd.f32 %v481, %v482
    %s484 = vtos %v483
    %v485 = vstv %s484
    %v486 = vmul.f32 %v468, %v468
    %v487 = vmul.f32 %v469, %v469
    %v488 = vsel %vm472, %v486, 0.0
    %v489 = vsel %vm472, %v487, 0.0
    %v490 = vadd.f32 %v488, %v489
    %491 = vadd.xlane.f32.xlu0 %v490
    %v492 = vpop.xlane.xlu0 %491
    %v493 = vrot.slane %v492, 4
    %v494 = vadd.f32 %v492, %v493
    %v495 = vrot.slane %v494, 2
    %v496 = vadd.f32 %v494, %v495
    %v497 = vrot.slane %v496, 1
    %v498 = vadd.f32 %v496, %v497
    %s499 = vtos %v498
    %v500 = vstv %s499
    %v501 = vadd.f32 %v485, %v500
    %v502 = vmul.f32 %v501, 0.0009765625
    %v505 = vlaneseq
    %v506 = vshrl.u32 %v505, 7
    %v507 = vsub.s32 0, %v506
    %v508 = vrot.slane %v101, %v507
    %v509 = vlaneseq
    %v510 = vshrl.u32 %v509, 7
    %v511 = vsub.s32 2, %v510
    %v512 = vrot.slane %v101, %v511
    %v513 = vlaneseq
    %v514 = vshrl.u32 %v513, 7
    %v515 = vsub.s32 0, %v514
    %v516 = vrot.slane %v102, %v515
    %v517 = vlaneseq
    %v518 = vshrl.u32 %v517, 7
    %v519 = vsub.s32 2, %v518
    %v520 = vrot.slane %v102, %v519
    %v521 = vsel %vm437, %v516, %v508
    %v522 = vsel %vm437, %v520, %v512
    %527 = vrot.lane.b32.xlu0 %v412, 1
    %v528 = vpop.permute.xlu0 %527
    %529 = vrot.lane.b32.xlu0 %v413, 1
    %v530 = vpop.permute.xlu0 %529
    %v531 = vsel %vm248, %v528, %v530
    %v535 = vsub.f32 %v412, %v528
    %v536 = vsub.f32 %v413, %v531
    %v537 = vsub.f32 0.0, %v530
    %538 = vrot.lane.b32.xlu0 %v521, 1
    %v539 = vpop.permute.xlu0 %538
    %540 = vrot.lane.b32.xlu0 %v522, 1
    %v541 = vpop.permute.xlu0 %540
    %v542 = vsel %vm248, %v539, %v541
    %v546 = vsub.f32 %v521, %v539
    %v547 = vsub.f32 %v522, %v542
    %v548 = vsub.f32 0.0, %v541
    %v549 = vsub.f32 %v535, %v546
    %v550 = vsub.f32 %v536, %v547
    %v551 = vsub.f32 %v537, %v548
    %555 = vrot.lane.b32.xlu0 %v549, 127
    %v556 = vpop.permute.xlu0 %555
    %557 = vrot.lane.b32.xlu0 %v550, 127
    %v558 = vpop.permute.xlu0 %557
    %559 = vrot.lane.b32.xlu0 %v551, 127
    %v560 = vpop.permute.xlu0 %559
    %v561 = vsel %vm287, %v556, %v558
    %v562 = vsel %vm287, %v558, %v560
    %v565 = vsel %vm279, %v561, 0.0
    %v566 = vsel %vm280, %v562, 0.0
    %567 = vrot.lane.b32.xlu0 %v412, 16
    %v568 = vpop.permute.xlu0 %567
    %569 = vrot.lane.b32.xlu0 %v413, 16
    %v570 = vpop.permute.xlu0 %569
    %v571 = vsel %vm184, %v568, %v570
    %v575 = vsub.f32 %v412, %v568
    %v576 = vsub.f32 %v413, %v571
    %v577 = vsub.f32 0.0, %v570
    %578 = vrot.lane.b32.xlu0 %v521, 16
    %v579 = vpop.permute.xlu0 %578
    %580 = vrot.lane.b32.xlu0 %v522, 16
    %v581 = vpop.permute.xlu0 %580
    %v582 = vsel %vm184, %v579, %v581
    %v586 = vsub.f32 %v521, %v579
    %v587 = vsub.f32 %v522, %v582
    %v588 = vsub.f32 0.0, %v581
    %v589 = vsub.f32 %v575, %v586
    %v590 = vsub.f32 %v576, %v587
    %v591 = vsub.f32 %v577, %v588
    %595 = vrot.lane.b32.xlu0 %v589, 112
    %v596 = vpop.permute.xlu0 %595
    %597 = vrot.lane.b32.xlu0 %v590, 112
    %v598 = vpop.permute.xlu0 %597
    %599 = vrot.lane.b32.xlu0 %v591, 112
    %v600 = vpop.permute.xlu0 %599
    %v601 = vsel %vm353, %v596, %v598
    %v602 = vsel %vm353, %v598, %v600
    %v605 = vsel %vm345, %v601, 0.0
    %v606 = vsel %vm346, %v602, 0.0
    %v607 = vmul.f32 %v565, %v565
    %v608 = vmul.f32 %v566, %v566
    %v609 = vsel %vm472, %v607, 0.0
    %v610 = vsel %vm472, %v608, 0.0
    %v611 = vadd.f32 %v609, %v610
    %612 = vadd.xlane.f32.xlu0 %v611
    %v613 = vpop.xlane.xlu0 %612
    %v614 = vrot.slane %v613, 4
    %v615 = vadd.f32 %v613, %v614
    %v616 = vrot.slane %v615, 2
    %v617 = vadd.f32 %v615, %v616
    %v618 = vrot.slane %v617, 1
    %v619 = vadd.f32 %v617, %v618
    %s620 = vtos %v619
    %v621 = vstv %s620
    %v622 = vmul.f32 %v621, 0.0020833334
    %v623 = vmul.f32 %v605, %v605
    %v624 = vmul.f32 %v606, %v606
    %v625 = vsel %vm472, %v623, 0.0
    %v626 = vsel %vm472, %v624, 0.0
    %v627 = vadd.f32 %v625, %v626
    %628 = vadd.xlane.f32.xlu0 %v627
    %v629 = vpop.xlane.xlu0 %628
    %v630 = vrot.slane %v629, 4
    %v631 = vadd.f32 %v629, %v630
    %v632 = vrot.slane %v631, 2
    %v633 = vadd.f32 %v631, %v632
    %v634 = vrot.slane %v633, 1
    %v635 = vadd.f32 %v633, %v634
    %s636 = vtos %v635
    %v637 = vstv %s636
    %v638 = vmul.f32 %v637, 0.0020833334
    %v639 = vadd.f32 %v622, %v638
    %v640 = vmul.f32 %v639, 0.09
    %v641 = vadd.f32 %v502, %v640
    %v642 = vand.u32 2147483647, %v442
    %v643 = vand.u32 2147483647, %v443
    %v644 = vsel %vm472, %v642, 0.0
    %v645 = vsel %vm472, %v643, 0.0
    %v646 = vadd.f32 %v644, %v645
    %647 = vadd.xlane.f32.xlu0 %v646
    %v648 = vpop.xlane.xlu0 %647
    %v649 = vrot.slane %v648, 4
    %v650 = vadd.f32 %v648, %v649
    %v651 = vrot.slane %v650, 2
    %v652 = vadd.f32 %v650, %v651
    %v653 = vrot.slane %v652, 1
    %v654 = vadd.f32 %v652, %v653
    %s655 = vtos %v654
    %v656 = vstv %s655
    %v657 = vrcp.pop %v411
    %v658 = vmul.f32 %v656, %v657
    %v659 = vmul.f32 %v658, 0.0009765625
    %v660 = vand.u32 2147483647, %v468
    %v661 = vand.u32 2147483647, %v469
    %v662 = vsel %vm472, %v660, 0.0
    %v663 = vsel %vm472, %v661, 0.0
    %v664 = vadd.f32 %v662, %v663
    %665 = vadd.xlane.f32.xlu0 %v664
    %v666 = vpop.xlane.xlu0 %665
    %v667 = vrot.slane %v666, 4
    %v668 = vadd.f32 %v666, %v667
    %v669 = vrot.slane %v668, 2
    %v670 = vadd.f32 %v668, %v669
    %v671 = vrot.slane %v670, 1
    %v672 = vadd.f32 %v670, %v671
    %s673 = vtos %v672
    %v674 = vstv %s673
    %v675 = vrcp.pop %v414
    %v676 = vmul.f32 %v674, %v675
    %v677 = vmul.f32 %v676, 0.0009765625
    %vm678 = vcmp.eq.s32.totalorder %v60, 0
    %v679 = vsel %vm678, %v641, 0.0
    %vm680 = vcmp.eq.s32.totalorder %v60, 1
    %v681 = vsel %vm680, %v659, %v679
    %vm682 = vcmp.eq.s32.totalorder %v60, 2
    %v683 = vsel %vm682, %v677, %v681
    %684 = vst [vmem:[%s6] sm:$0x1] %v683
    // Predicated region
    $region38: #{_score_regression_fused.1} parent=1 // pred_check
      _
    $region39: #{_score_regression_fused.1} parent=1 // pred_check_branch
      %686 = sbr.rel (0) target = $region41
    $region40: #{_score_regression_fused.1} parent=1 // pred_region
      _
    $region41: #{_score_regression_fused.1} parent=1 // pred_fallthru
      _
    // Predicated region
    $region42: #{_score_regression_fused.1} parent=1 // pred_check
      _
    $region43: #{_score_regression_fused.1} parent=1 // pred_check_branch
      %688 = sbr.rel (0) target = $region45
    $region44: #{_score_regression_fused.1} parent=1 // pred_region
      _
    $region45: #{_score_regression_fused.1} parent=1 // pred_fallthru
      _
    %689 = vsyncpa [#allocation3], 1
    %690 = vsyncpa [#allocation5], 1

</llo_original>
